<compile_context>
chip_gen: v6e
topology: v6e:2x2x1
jax: 0.10.0
libtpu: 0.0.40
codegen_flags: <defaults>
</compile_context>

<pallas_src>
import jax
import jax.numpy as jnp
from jax.experimental import pallas as pl
from jax.experimental.pallas import tpu as pltpu

EPS = 1e-5
_MAX_TILE = 1 << 15  # hard cap on HW-tile columns (keeps a few grid steps to pipeline)


# --------------------------------------------------------------------------- kernels
def _stats_kernel(x_ref, w_ref, sum_ref, sq_ref):
    """Pass 1: per-output-channel sum and sum-of-squares of conv1x1(relu(x_noisy))."""
    t = pl.program_id(1)
    a = jnp.maximum(x_ref[0], 0.0)                                     # (C_in, T)
    y = jnp.dot(w_ref[...], a, preferred_element_type=jnp.float32)     # (C_out, T)

    @pl.when(t == 0)
    def _():
        sum_ref[...] = jnp.zeros_like(sum_ref)
        sq_ref[...] = jnp.zeros_like(sq_ref)

    sum_ref[0] += jnp.sum(y, axis=1, keepdims=True)                    # (C_out, 1)
    sq_ref[0] += jnp.sum(y * y, axis=1, keepdims=True)                 # (C_out, 1)


def _apply_kernel(x_ref, w_ref, shift_ref, o_ref):
    """Pass 2: conv1x1(relu(x_noisy)) with BN scale pre-folded into w; add BN shift."""
    a = jnp.maximum(x_ref[0], 0.0)                                     # (C_in, T)
    y = jnp.dot(w_ref[...], a, preferred_element_type=jnp.float32)     # (C_out, T)
    o_ref[0] = (y + shift_ref[...]).astype(o_ref.dtype)


# --------------------------------------------------------------------------- tiling
def _vmem_budgets():
    """(stream_budget, vmem_limit) in bytes, derived per TPU generation."""
    try:
        phys = int(pltpu.get_tpu_info().vmem_capacity_bytes)
    except Exception:
        phys = 64 << 20  # conservative fallback (v7x per-TC VMEM)
    vmem_limit = min(phys // 2, 96 << 20)
    stream_budget = vmem_limit // 2  # headroom for compiler scratch / semaphores
    return stream_budget, vmem_limit


def _pick_hw_tile(hw, c_in, c_out, stream_budget):
    """Largest lane-dense (multiple of 128) HW tile whose double-buffered streams fit."""
    per_col = 8 * (c_in + c_out)            # f32, x-block + out-block, 2x buffers each
    fixed = 8 * c_out * c_in + (256 << 10)  # double-buffered weight + slack
    t = max(128, (stream_budget - fixed) // per_col)
    t = (t // 128) * 128
    hw_up = pl.cdiv(hw, 128) * 128
    return max(128, min(t, hw_up, _MAX_TILE))


# --------------------------------------------------------------------------- wrapper
def noise_layer_forward(x_nchw, w_oi, bias, gamma, beta, *, level, noise_key):
    """x_nchw: (N, C_in, H, W) f32.
    w_oi: (C_out, C_in) — PyTorch 1x1 conv weight squeezed over kernel dims.
    bias, gamma, beta: (C_out,).  Returns (N, C_out, H, W) f32."""
    del bias  # Conv bias is exactly cancelled by training-mode BN mean subtraction.

    N, C_in, H, W = x_nchw.shape
    C_out = w_oi.shape[0]
    HW = H * W

    stream_budget, vmem_limit = _vmem_budgets()
    T = _pick_hw_tile(HW, C_in, C_out, stream_budget)
    HW_pad = pl.cdiv(HW, T) * T
    n_t = HW_pad // T

    # Fresh uniform(-level, level) noise with x's full shape (the torch branch taken
    # whenever the stored (1, C_in, 1, 1) noise mismatches x's shape).
    noise = jax.random.uniform(noise_key, x_nchw.shape, dtype=jnp.float32,
                               minval=-level, maxval=level)
    x3 = (x_nchw.astype(jnp.float32) + noise).reshape(N, C_in, HW)
    if HW_pad != HW:
        # Zero padding keeps pass-1 stats exact: relu(0) = 0 -> W @ 0 contributes 0.
        x3 = jnp.pad(x3, ((0, 0), (0, 0), (0, HW_pad - HW)))
    w = w_oi.astype(jnp.float32)

    # ---------- Pass 1: global (over N, H, W) per-channel sum / sum-of-squares ----------
    sum_nc, sq_nc = pl.pallas_call(
        _stats_kernel,
        out_shape=(
            jax.ShapeDtypeStruct((N, C_out, 1), jnp.float32),
            jax.ShapeDtypeStruct((N, C_out, 1), jnp.float32),
        ),
        grid=(N, n_t),
        in_specs=[
            pl.BlockSpec((1, C_in, T), lambda n, t: (n, 0, t)),
            pl.BlockSpec((C_out, C_in), lambda n, t: (0, 0)),
        ],
        out_specs=(
            pl.BlockSpec((1, C_out, 1), lambda n, t: (n, 0, 0)),
            pl.BlockSpec((1, C_out, 1), lambda n, t: (n, 0, 0)),
        ),
        compiler_params=pltpu.CompilerParams(
            dimension_semantics=("parallel", "arbitrary"),
            vmem_limit_bytes=vmem_limit),
    )(x3, w)

    # BN fold on (C_out,)-sized arrays (tiny, stays in plain JAX).
    m_total = float(N * HW)  # true element count; zero-padded columns contribute 0
    mean = jnp.sum(sum_nc[:, :, 0], axis=0) / m_total
    ex2 = jnp.sum(sq_nc[:, :, 0], axis=0) / m_total
    var = jnp.maximum(ex2 - mean * mean, 0.0)  # biased (training-mode) variance
    # TODO(synk): E[y^2]-E[y]^2 in f32 can cancel for large-mean activations; switch to a
    # compensated/Welford accumulation if that regime matters.
    scale = gamma.astype(jnp.float32) * jax.lax.rsqrt(var + EPS)
    shift = (beta.astype(jnp.float32) - mean * scale).reshape(C_out, 1)
    w_scaled = scale.reshape(C_out, 1) * w  # fold BN scale into the conv weight

    # ---------- Pass 2: normalize (fully parallel tiles, lane-dense output) ----------
    out3 = pl.pallas_call(
        _apply_kernel,
        out_shape=jax.ShapeDtypeStruct((N, C_out, HW_pad), jnp.float32),
        grid=(N, n_t),
        in_specs=[
            pl.BlockSpec((1, C_in, T), lambda n, t: (n, 0, t)),
            pl.BlockSpec((C_out, C_in), lambda n, t: (0, 0)),
            pl.BlockSpec((C_out, 1), lambda n, t: (0, 0)),
        ],
        out_specs=pl.BlockSpec((1, C_out, T), lambda n, t: (n, 0, t)),
        compiler_params=pltpu.CompilerParams(
            dimension_semantics=("parallel", "parallel"),
            vmem_limit_bytes=vmem_limit),
    )(x3, w_scaled, shift)

    return out3[:, :, :HW].reshape(N, C_out, H, W)


# --------------------------------------------------------------------------- self-test
if __name__ == "__main__":
    key = jax.random.PRNGKey(0)
    k_x, k_w, k_b, k_n = jax.random.split(key, 4)

    # Small shapes consistent with the module.
    N, C_in, H, W = 2, 4, 16, 16
    C_out = 8
    level = 0.1

    x = jax.random.normal(k_x, (N, C_in, H, W), dtype=jnp.float32)

    # Deterministic parameter init (Conv2d 1x1 weight/bias; BN gamma/beta defaults).
    fan_in = C_in  # kernel_size = 1
    bound = 1.0 / (fan_in ** 0.5)
    w_oi = jax.random.uniform(k_w, (C_out, C_in), dtype=jnp.float32,
                              minval=-bound, maxval=bound)
    bias = jax.random.uniform(k_b, (C_out,), dtype=jnp.float32,
                              minval=-bound, maxval=bound)
    gamma = jnp.ones((C_out,), dtype=jnp.float32)
    beta = jnp.zeros((C_out,), dtype=jnp.float32)

    out = noise_layer_forward(x, w_oi, bias, gamma, beta, level=level, noise_key=k_n)
    out = jax.block_until_ready(out)
    assert out.shape == (N, C_out, H, W)

    # Training-mode BN with gamma=1, beta=0 => per-channel batch mean ~0, var ~1.
    ch_mean = jnp.mean(out, axis=(0, 2, 3))
    ch_var = jnp.var(out, axis=(0, 2, 3))
    assert float(jnp.max(jnp.abs(ch_mean))) < 1e-3, ch_mean
    assert float(jnp.max(jnp.abs(ch_var - 1.0))) < 5e-2, ch_var

    print("KERNEL_OK")
</pallas_src>

<mosaic_0001>
module attributes {stable_mosaic.version = 11 : i64} {
  func.func @_stats_kernel(%arg0: i32, %arg1: i32, %arg2: memref<1x4x256xf32, #tpu.memory_space<vmem>>, %arg3: memref<8x4xf32, #tpu.memory_space<vmem>>, %arg4: memref<1x8x1xf32, #tpu.memory_space<vmem>>, %arg5: memref<1x8x1xf32, #tpu.memory_space<vmem>>) attributes {dimension_semantics = [#tpu.dimension_semantics<parallel>, #tpu.dimension_semantics<arbitrary>], iteration_bounds = array<i64: 2, 1>, scalar_prefetch = 0 : i64, scratch_operands = 0 : i64, tpu.core_type = #tpu.core_type<tc>, window_params = [{transform_indices = @transform_0, window_bounds = array<i64: 1, 4, 256>}, {pipeline_mode = #tpu.pipeline_mode<synchronous>, transform_indices = @transform_1, window_bounds = array<i64: 8, 4>}, {transform_indices = @transform_2, window_bounds = array<i64: 1, 8, 1>}, {transform_indices = @transform_3, window_bounds = array<i64: 1, 8, 1>}]} {
    %c0 = arith.constant 0 : index
    %c0_0 = arith.constant 0 : index
    %c0_1 = arith.constant 0 : index
    %0 = vector.load %arg2[%c0, %c0_0, %c0_1] : memref<1x4x256xf32, #tpu.memory_space<vmem>>, vector<1x4x256xf32>
    %1 = vector.shape_cast %0 : vector<1x4x256xf32> to vector<4x256xf32>
    %cst = arith.constant 0.000000e+00 : f32
    %2 = vector.broadcast %cst : f32 to vector<4x256xf32>
    %3 = arith.maximumf %1, %2 : vector<4x256xf32>
    %c0_2 = arith.constant 0 : index
    %c0_3 = arith.constant 0 : index
    %4 = vector.load %arg3[%c0_2, %c0_3] : memref<8x4xf32, #tpu.memory_space<vmem>>, vector<8x4xf32>
    %cst_4 = arith.constant dense<0.000000e+00> : vector<8x256xf32>
    %5 = tpu.matmul %4, %3, %cst_4 {dimension_numbers = #tpu.dot_dimension_numbers<[1], [0], [0], [1], [0, 0, 1, 1], [], []>} : vector<8x4xf32>, vector<4x256xf32>, vector<8x256xf32> -> vector<8x256xf32>
    %c0_i32 = arith.constant 0 : i32
    %6 = arith.cmpi eq, %arg1, %c0_i32 : i32
    %7 = arith.extui %6 : i1 to i32
    %c0_i32_5 = arith.constant 0 : i32
    %8 = arith.cmpi ne, %7, %c0_i32_5 : i32
    scf.if %8 {
      %cst_20 = arith.constant 0.000000e+00 : f32
      %26 = vector.broadcast %cst_20 : f32 to vector<1x8x1xf32>
      %c0_21 = arith.constant 0 : index
      %c0_22 = arith.constant 0 : index
      %c0_23 = arith.constant 0 : index
      %27 = vector.load %arg4[%c0_21, %c0_22, %c0_23] : memref<1x8x1xf32, #tpu.memory_space<vmem>>, vector<1x8x1xf32>
      tpu.vector_store %arg4[%c0_21, %c0_22, %c0_23], %26 {strides = array<i32>} : memref<1x8x1xf32, #tpu.memory_space<vmem>>, vector<1x8x1xf32>,
      %cst_24 = arith.constant 0.000000e+00 : f32
      %28 = vector.broadcast %cst_24 : f32 to vector<1x8x1xf32>
      %c0_25 = arith.constant 0 : index
      %c0_26 = arith.constant 0 : index
      %c0_27 = arith.constant 0 : index
      %29 = vector.load %arg5[%c0_25, %c0_26, %c0_27] : memref<1x8x1xf32, #tpu.memory_space<vmem>>, vector<1x8x1xf32>
      tpu.vector_store %arg5[%c0_25, %c0_26, %c0_27], %28 {strides = array<i32>} : memref<1x8x1xf32, #tpu.memory_space<vmem>>, vector<1x8x1xf32>,
    } else {
    }
    %c0_6 = arith.constant 0 : index
    %c0_7 = arith.constant 0 : index
    %c0_8 = arith.constant 0 : index
    %9 = vector.load %arg4[%c0_6, %c0_7, %c0_8] : memref<1x8x1xf32, #tpu.memory_space<vmem>>, vector<1x8x1xf32>
    %10 = vector.shape_cast %9 : vector<1x8x1xf32> to vector<8x1xf32>
    %cst_9 = arith.constant dense<0.000000e+00> : vector<8xf32>
    %11 = vector.multi_reduction <add>, %5, %cst_9 [1] : vector<8x256xf32> to vector<8xf32>
    %12 = vector.shape_cast %11 : vector<8xf32> to vector<8x1xf32>
    %13 = arith.addf %10, %12 : vector<8x1xf32>
    %c0_10 = arith.constant 0 : index
    %c0_11 = arith.constant 0 : index
    %c0_12 = arith.constant 0 : index
    %14 = vector.load %arg4[%c0_10, %c0_11, %c0_12] : memref<1x8x1xf32, #tpu.memory_space<vmem>>, vector<1x8x1xf32>
    %15 = vector.shape_cast %14 : vector<1x8x1xf32> to vector<8x1xf32>
    %16 = vector.shape_cast %13 : vector<8x1xf32> to vector<1x8x1xf32>
    tpu.vector_store %arg4[%c0_10, %c0_11, %c0_12], %16 {strides = array<i32>} : memref<1x8x1xf32, #tpu.memory_space<vmem>>, vector<1x8x1xf32>,
    %c0_13 = arith.constant 0 : index
    %c0_14 = arith.constant 0 : index
    %c0_15 = arith.constant 0 : index
    %17 = vector.load %arg5[%c0_13, %c0_14, %c0_15] : memref<1x8x1xf32, #tpu.memory_space<vmem>>, vector<1x8x1xf32>
    %18 = vector.shape_cast %17 : vector<1x8x1xf32> to vector<8x1xf32>
    %19 = arith.mulf %5, %5 : vector<8x256xf32>
    %cst_16 = arith.constant dense<0.000000e+00> : vector<8xf32>
    %20 = vector.multi_reduction <add>, %19, %cst_16 [1] : vector<8x256xf32> to vector<8xf32>
    %21 = vector.shape_cast %20 : vector<8xf32> to vector<8x1xf32>
    %22 = arith.addf %18, %21 : vector<8x1xf32>
    %c0_17 = arith.constant 0 : index
    %c0_18 = arith.constant 0 : index
    %c0_19 = arith.constant 0 : index
    %23 = vector.load %arg5[%c0_17, %c0_18, %c0_19] : memref<1x8x1xf32, #tpu.memory_space<vmem>>, vector<1x8x1xf32>
    %24 = vector.shape_cast %23 : vector<1x8x1xf32> to vector<8x1xf32>
    %25 = vector.shape_cast %22 : vector<8x1xf32> to vector<1x8x1xf32>
    tpu.vector_store %arg5[%c0_17, %c0_18, %c0_19], %25 {strides = array<i32>} : memref<1x8x1xf32, #tpu.memory_space<vmem>>, vector<1x8x1xf32>,
    return
  }
  func.func @transform_0(%arg0: i32, %arg1: i32) -> (i32, i32, i32) {
    %c0_i32 = arith.constant 0 : i32
    %c0_i32_0 = arith.constant 0 : i32
    return %arg0, %c0_i32, %arg1 : i32, i32, i32
  }
  func.func @transform_1(%arg0: i32, %arg1: i32) -> (i32, i32) {
    %c0_i32 = arith.constant 0 : i32
    %c0_i32_0 = arith.constant 0 : i32
    %c0_i32_1 = arith.constant 0 : i32
    return %c0_i32, %c0_i32_0 : i32, i32
  }
  func.func @transform_2(%arg0: i32, %arg1: i32) -> (i32, i32, i32) {
    %c0_i32 = arith.constant 0 : i32
    %c0_i32_0 = arith.constant 0 : i32
    %c0_i32_1 = arith.constant 0 : i32
    return %arg0, %c0_i32, %c0_i32_0 : i32, i32, i32
  }
  func.func @transform_3(%arg0: i32, %arg1: i32) -> (i32, i32, i32) {
    %c0_i32 = arith.constant 0 : i32
    %c0_i32_0 = arith.constant 0 : i32
    %c0_i32_1 = arith.constant 0 : i32
    return %arg0, %c0_i32, %c0_i32_0 : i32, i32, i32
  }
}

</mosaic_0001>

<llo_original>
// kernel: tpu_custom_call.1
$region0: #{tpu_custom_call.1}
  #allocation0 [shape = 'u32[]', space=smem, size = 0x4, offset = 0x4, fixed_abs, tag = 'smem constant byte address 0x4 - core index']
  #allocation1 [shape = 'u32[144,128]{1,0:T(1,128)}', space=vmem, size = 0x12000, scoped, tag = 'internal scratch']
  %s0 = inlined_call_operand.hbm [shape: f32[2,4,256], index: 0, kind: input, shape index: {}]
  %s1 = inlined_call_operand.vmem [shape: f32[8,4], index: 1, kind: input, shape index: {}]
  %s2 = inlined_call_operand.vmem [shape: f32[2,8,1], index: 2, kind: output, shape index: {0}]
  %s3 = inlined_call_operand.vmem [shape: f32[2,8,1], index: 3, kind: output, shape index: {1}]
  %4 = xla_tuple %s2, %s3
  %s5 = sld [smem:[#allocation0]]
  $region57: #{tpu_custom_call.1} parent=0
    _
  %s7 = ssub.s32 1, %s5
  %s8 = scalar_select 0, %s7, %s5
  $region1: #{tpu_custom_call.1} parent=0
    #allocation2 [shape = 'u8[8192]{0}', space=vmem, size = 0x2000, scoped, tag = 'input window, operand 0']
    #allocation3 [shape = 's32[2]{0}', space=sflag, size = 0x8, scoped, tag = 'scoped memory for tpu_custom_call.1']
    %9 = vsyncpa [#allocation3], 0
    %s10 = scalar_lea.sflag [#allocation3], 1
    %11 = vsyncpa %s10, 0
    loop: start=0, step=1, limit=4
    $region2: #{tpu_custom_call.1} parent=1 // loop_pre_header
      _
    $region3: #{tpu_custom_call.1} parent=1 // loop_header
      %s13 = sphi 0, %s17
      %p14 = scmp.ge.s32.totalorder %s13, 4
      %s20 = sphi 0, %s32
      %s21 = sphi 0, %s28
      %s22 = sphi 0, %s20
      %s23 = sphi 0, %s21
      %s24 = sphi 0, %s22
      %s25 = sphi 0, %s23
      %s37 = sphi 0, %s39
      %s40 = sphi 0, %s37
      %s41 = sphi 0, %s40
      %s57 = sphi 0, %s41
      %s61 = sphi 0, %s61
      %s63 = sphi 0, %s61
      %s64 = sphi 0, %s63
      %s78 = sphi 0, %s64
      %s84 = sphi 0, %s86
      %s87 = sphi 0, %s84
      %s88 = sphi 0, %s87
      %s104 = sphi 0, %s88
      %s110 = sphi 0, %s112
      %s113 = sphi 0, %s110
      %s114 = sphi 0, %s113
      %s130 = sphi 0, %s114
    $region4: #{tpu_custom_call.1} parent=1 // loop_header_branch
      %16 = sbr.rel (%p14) target = $region8
    $region5: #{tpu_custom_call.1} parent=1 // loop_body
      %s18 = ssub.s32 %s13, 1
      %s19 = ssub.s32 %s13, 2
      %s26 = sadd.s32 1, %s21
      %p27 = scmp.ge.s32.totalorder %s26, 1
      %s28 = scalar_select %p27, 0, %s26
      %s29 = sadd.s32 1, %s20
      %s30 = scalar_select %p27, %s29, %s20
      %p31 = scmp.ge.s32.totalorder %s30, 2
      %s32 = scalar_select %p31, 0, %s30
      %s33 = ssub.s32 %s20, %s32
      %s34 = ssub.s32 %s21, %s28
      %s35 = sor.u32 %s33, %s34
      %p36 = scmp.eq.s32.totalorder %s35, 0
      %s38 = sadd.s32 %s37, 1
      %s39 = scalar_select %p36, %s37, %s38
      %p42 = pneg %p36
      %p43 = scmp.eq.s32.totalorder %s13, 1
      %p44 = por %p42, %p43
      %p45 = scmp.ne.s32.totalorder %s37, %s40
      %p46 = scmp.eq.s32.totalorder %s13, 0
      %p47 = por %p45, %p46
      %p48 = scmp.ne.s32.totalorder %s37, %s40
      %p49 = scmp.eq.s32.totalorder %s18, 1
      %p50 = por %p48, %p49
      %p51 = scmp.ne.s32.totalorder %s40, %s41
      %p52 = scmp.eq.s32.totalorder %s18, 0
      %p53 = por %p51, %p52
      %p54 = scmp.ne.s32.totalorder %s40, %s41
      %p55 = scmp.eq.s32.totalorder %s19, 1
      %p56 = por %p54, %p55
      %p58 = scmp.ne.s32.totalorder %s41, %s57
      %p59 = scmp.eq.s32.totalorder %s19, 0
      %p60 = por %p58, %p59
      %s62 = sadd.s32 %s61, 1
      %p65 = scmp.eq.s32.totalorder %s13, 1
      %p66 = scmp.ne.s32.totalorder %s61, %s63
      %p67 = scmp.eq.s32.totalorder %s13, 0
      %p68 = por %p66, %p67
      %p69 = scmp.ne.s32.totalorder %s61, %s63
      %p70 = scmp.eq.s32.totalorder %s18, 1
      %p71 = por %p69, %p70
      %p72 = scmp.ne.s32.totalorder %s63, %s64
      %p73 = scmp.eq.s32.totalorder %s18, 0
      %p74 = por %p72, %p73
      %p75 = scmp.ne.s32.totalorder %s63, %s64
      %p76 = scmp.eq.s32.totalorder %s19, 1
      %p77 = por %p75, %p76
      %p79 = scmp.ne.s32.totalorder %s64, %s78
      %p80 = scmp.eq.s32.totalorder %s19, 0
      %p81 = por %p79, %p80
      %s82 = ssub.s32 %s20, %s32
      %p83 = scmp.eq.s32.totalorder %s82, 0
      %s85 = sadd.s32 %s84, 1
      %s86 = scalar_select %p83, %s84, %s85
      %p89 = pneg %p83
      %p90 = scmp.eq.s32.totalorder %s13, 1
      %p91 = por %p89, %p90
      %p92 = scmp.ne.s32.totalorder %s84, %s87
      %p93 = scmp.eq.s32.totalorder %s13, 0
      %p94 = por %p92, %p93
      %p95 = scmp.ne.s32.totalorder %s84, %s87
      %p96 = scmp.eq.s32.totalorder %s18, 1
      %p97 = por %p95, %p96
      %p98 = scmp.ne.s32.totalorder %s87, %s88
      %p99 = scmp.eq.s32.totalorder %s18, 0
      %p100 = por %p98, %p99
      %p101 = scmp.ne.s32.totalorder %s87, %s88
      %p102 = scmp.eq.s32.totalorder %s19, 1
      %p103 = por %p101, %p102
      %p105 = scmp.ne.s32.totalorder %s88, %s104
      %p106 = scmp.eq.s32.totalorder %s19, 0
      %p107 = por %p105, %p106
      %s108 = ssub.s32 %s20, %s32
      %p109 = scmp.eq.s32.totalorder %s108, 0
      %s111 = sadd.s32 %s110, 1
      %s112 = scalar_select %p109, %s110, %s111
      %p115 = pneg %p109
      %p116 = scmp.eq.s32.totalorder %s13, 1
      %p117 = por %p115, %p116
      %p118 = scmp.ne.s32.totalorder %s110, %s113
      %p119 = scmp.eq.s32.totalorder %s13, 0
      %p120 = por %p118, %p119
      %p121 = scmp.ne.s32.totalorder %s110, %s113
      %p122 = scmp.eq.s32.totalorder %s18, 1
      %p123 = por %p121, %p122
      %p124 = scmp.ne.s32.totalorder %s113, %s114
      %p125 = scmp.eq.s32.totalorder %s18, 0
      %p126 = por %p124, %p125
      %p127 = scmp.ne.s32.totalorder %s113, %s114
      %p128 = scmp.eq.s32.totalorder %s19, 1
      %p129 = por %p127, %p128
      %p131 = scmp.ne.s32.totalorder %s114, %s130
      %p132 = scmp.eq.s32.totalorder %s19, 0
      %p133 = por %p131, %p132
      %p134 = scmp.le.s32.totalorder 1, %s13
      %p135 = scmp.lt.s32.totalorder %s13, 3
      %p136 = pnand %p134, %p135
      %p137 = pneg %p136
      // Predicated region
      $region9: #{tpu_custom_call.1} parent=5 // pred_check
        _
      $region10: #{tpu_custom_call.1} parent=5 // pred_check_branch
        %139 = sbr.rel (%p136) target = $region12
      $region11: #{tpu_custom_call.1} parent=5 // pred_region
        %s140 = ssub.s32 %s13, 1
        // Predicated region
        $region13: #{tpu_custom_call.1} parent=11 // pred_check
          %p141 = pneg %p74
        $region14: #{tpu_custom_call.1} parent=11 // pred_check_branch
          %143 = sbr.rel (%p141) target = $region16
        $region15: #{tpu_custom_call.1} parent=11 // pred_region
          _
        $region16: #{tpu_custom_call.1} parent=11 // pred_fallthru
          _
      $region12: #{tpu_custom_call.1} parent=5 // pred_fallthru
        _
      %p144 = scmp.lt.s32.totalorder %s13, 2
      // Predicated region
      $region17: #{tpu_custom_call.1} parent=5 // pred_check
        %p145 = pneg %p144
      $region18: #{tpu_custom_call.1} parent=5 // pred_check_branch
        %147 = sbr.rel (%p145) target = $region20
      $region19: #{tpu_custom_call.1} parent=5 // pred_region
        // Predicated region
        $region21: #{tpu_custom_call.1} parent=19 // pred_check
          %p148 = pneg %p47
        $region22: #{tpu_custom_call.1} parent=19 // pred_check_branch
          %150 = sbr.rel (%p148) target = $region24
        $region23: #{tpu_custom_call.1} parent=19 // pred_region
          %s151 = sand.u32 %s37, 1
          %s152 = scalar_lea.sflag [#allocation3], %s151
          %s153 = sand.u32 %s37, 1
          %s154 = smul.addr %s153, 8
          %s155 = scalar_lea.vmem [#allocation2], %s154
          %s156 = smul.u32 2, %s21
          %s158 = ssub.s32 128, 128
          %159 = vsyncadd %s152, %s158
          %s160 = smul.addr %s20, 2
          %s161 = sadd.s32 %s156, %s160
          %s162 = smul.addr %s161, 64
          %s163 = scalar_lea.hbm %s0, %s162
          %s165 = sshll.u32 %s155, 4
          %s166 = int_to_ptr.vmem [resolvable:$true] %s165
          %168 = dma.hbm_to_vmem [thread:$0]  %s163, 128, %s166, %s152
        $region24: #{tpu_custom_call.1} parent=19 // pred_fallthru
          _
      $region20: #{tpu_custom_call.1} parent=5 // pred_fallthru
        _
      %p169 = scmp.le.s32.totalorder 1, %s13
      %p170 = scmp.lt.s32.totalorder %s13, 3
      %p171 = pnand %p169, %p170
      %p172 = pneg %p171
      // Predicated region
      $region25: #{tpu_custom_call.1} parent=5 // pred_check
        _
      $region26: #{tpu_custom_call.1} parent=5 // pred_check_branch
        %174 = sbr.rel (%p171) target = $region28
      $region27: #{tpu_custom_call.1} parent=5 // pred_region
        %s175 = ssub.s32 %s13, 1
        %s176 = sand.u32 %s40, 1
        %s177 = scalar_lea.sflag [#allocation3], %s176
        %s178 = sand.u32 %s40, 1
        %s179 = smul.addr %s178, 8
        %s180 = scalar_lea.vmem [#allocation2], %s179
        // Predicated region
        $region29: #{tpu_custom_call.1} parent=27 // pred_check
          %p181 = pneg %p53
        $region30: #{tpu_custom_call.1} parent=27 // pred_check_branch
          %183 = sbr.rel (%p181) target = $region32
        $region31: #{tpu_custom_call.1} parent=27 // pred_region
          %184 = dma.done %s177, 128
        $region32: #{tpu_custom_call.1} parent=27 // pred_fallthru
          _
        %s185 = sand.u32 %s40, 1
        %s186 = scalar_lea.sflag [#allocation3], %s185
        %s187 = sand.u32 %s40, 1
        %s188 = smul.addr %s187, 8
        %s189 = scalar_lea.vmem [#allocation2], %s188
        %p190 = pneg %p53
        %p191 = pneg %p50
        %p192 = pneg %p74
        %p193 = pneg %p71
        %p194 = pneg %p100
        %p195 = pneg %p97
        %p196 = scmp.lt.s32.totalorder %s22, 1
        %s197 = scalar_select %p196, %s22, 1
        %s198 = smul.addr %s197, 8
        %s199 = scalar_lea.vmem %s2, %s198
        %p200 = pneg %p126
        %p201 = pneg %p123
        %p202 = scmp.lt.s32.totalorder %s22, 1
        %s203 = scalar_select %p202, %s22, 1
        %s204 = smul.addr %s203, 8
        %s205 = scalar_lea.vmem %s3, %s204
        %s206 = smul.u32 2, %s23
        %p207 = scmp.lt.s32.totalorder %s22, 1
        %s208 = scalar_select %p207, %s22, 1
        %s209 = smul.addr %s208, 8
        %s210 = scalar_lea.vmem %s2, %s209
        %p211 = scmp.lt.s32.totalorder %s22, 1
        %s212 = scalar_select %p211, %s22, 1
        %s213 = smul.addr %s212, 8
        %s214 = scalar_lea.vmem %s3, %s213
        %v215 = vld [vmem:[%s180] sm:$0xff]
        %v216 = vmax.f32 %v215, 0.0
        %v217 = vld [vmem:[%s1] sm:$0xff]
        %v219 = vcombine.high %v216, %v216
        %vm220 = vcmask 31744
        %v222 = vsel %vm220, %v217, 0
        %vm224 = vcmask 1043456
        %v225 = vsel %vm224, %v216, 0
        %v227 = vsel %vm224, %v219, 0
        %229 = vmatprep.subr.mxu0 0.0
        %230 = vmatpush1.msra.mxu0 0.0
        %231 = vmatprep.subr.mxu0 0.0
        %232 = vmatpush1.msra.mxu0 0.0
        %233 = vmatprep.subr.mxu0 0.0
        %234 = vmatpush1.msra.mxu0 0.0
        %235 = vmatprep.subr.mxu0 0.0
        %236 = vmatpush1.msra.mxu0 0.0
        %237 = vmatprep.subr.mxu0 0.0
        %238 = vmatpush1.msra.mxu0 0.0
        %239 = vmatprep.subr.mxu0 0.0
        %240 = vmatpush1.msra.mxu0 0.0
        %241 = vmatprep.subr.mxu0 0.0
        %242 = vmatpush1.msra.mxu0 0.0
        %243 = vmatprep.subr.mxu0 0.0
        %244 = vmatpush1.msra.mxu0 0.0
        %245 = vmatprep.subr.mxu0 0.0
        %246 = vmatpush1.msra.mxu0 0.0
        %247 = vmatprep.subr.mxu0 0.0
        %248 = vmatpush1.msra.mxu0 0.0
        %249 = vmatprep.subr.mxu0 0.0
        %250 = vmatpush1.msra.mxu0 0.0
        %251 = vmatprep.subr.mxu0 0.0
        %252 = vmatpush1.msra.mxu0 0.0
        %253 = vmatprep.subr.mxu0 0.0
        %254 = vmatpush1.msra.mxu0 0.0
        %255 = vmatprep.subr.mxu0 0.0
        %256 = vmatpush1.msra.mxu0 0.0
        %257 = vmatprep.subr.mxu0 0.0
        %258 = vmatpush1.msra.mxu0 0.0
        %259 = vmatprep.subr.mxu0 %v227
        %260 = vmatpush1.msra.mxu0 %v225
        %261 = vmatprep.subr.mxu0 0.0
        %262 = vmatpush2.msra.mxu0 0.0
        %263 = vmatprep.subr.mxu0 0.0
        %264 = vmatpush2.msra.mxu0 0.0
        %265 = vmatprep.subr.mxu0 0.0
        %266 = vmatpush2.msra.mxu0 0.0
        %267 = vmatprep.subr.mxu0 0.0
        %268 = vmatpush2.msra.mxu0 0.0
        %269 = vmatprep.subr.mxu0 0.0
        %270 = vmatpush2.msra.mxu0 0.0
        %271 = vmatprep.subr.mxu0 0.0
        %272 = vmatpush2.msra.mxu0 0.0
        %273 = vmatprep.subr.mxu0 0.0
        %274 = vmatpush2.msra.mxu0 0.0
        %275 = vmatprep.subr.mxu0 0.0
        %276 = vmatpush2.msra.mxu0 0.0
        %277 = vmatprep.subr.mxu0 0.0
        %278 = vmatpush2.msra.mxu0 0.0
        %279 = vmatprep.subr.mxu0 0.0
        %280 = vmatpush2.msra.mxu0 0.0
        %281 = vmatprep.subr.mxu0 0.0
        %282 = vmatpush2.msra.mxu0 0.0
        %283 = vmatprep.subr.mxu0 0.0
        %284 = vmatpush2.msra.mxu0 0.0
        %285 = vmatprep.subr.mxu0 0.0
        %286 = vmatpush2.msra.mxu0 0.0
        %287 = vmatprep.subr.mxu0 0.0
        %288 = vmatpush2.msra.mxu0 0.0
        %289 = vmatprep.subr.mxu0 0.0
        %290 = vmatpush2.msra.mxu0 0.0
        %291 = vmatprep.subr.mxu0 0.0
        %292 = vmatpush2.msra.mxu0 0.0
        %293 = vmatprep.mubr.f32.mxu0 0.0
        %294 = vmatmul.mubr.f32.gmra.mxu0 %v222
        %v295 = vpop.f32.mrf.mxu0
        %v296 = vadd.f32 0.0, %v295
        %v297 = vpop.f32.mrf.mxu0
        %v298 = vadd.f32 0.0, %v297
        %299 = vdwg.mxu0
        %p300 = scmp.eq.s32.totalorder %s23, 0
        // Predicated region
        $region33: #{tpu_custom_call.1} parent=27 // pred_check
          %p301 = pneg %p300
        $region34: #{tpu_custom_call.1} parent=27 // pred_check_branch
          %303 = sbr.rel (%p301) target = $region36
        $region35: #{tpu_custom_call.1} parent=27 // pred_region
          %vm304 = vcmask 7168
          %305 = vst.msk [vmem:[%s210] sm:$0xff] %vm304, 0.0
          %306 = vst.msk [vmem:[%s214] sm:$0xff] %vm304, 0.0
        $region36: #{tpu_custom_call.1} parent=27 // pred_fallthru
          _
        %v307 = vld [vmem:[%s210] sm:$0xff]
        %v308 = vadd.f32 %v296, %v298
        %309 = vadd.xlane.f32.xlu0 %v308
        %v310 = vpop.xlane.xlu0 %309
        %v311 = vadd.f32 %v307, %v310
        %vm312 = vcmask 7168
        %313 = vst.msk [vmem:[%s210] sm:$0xff] %vm312, %v311
        %v314 = vld [vmem:[%s214] sm:$0xff]
        %v315 = vmul.f32 %v296, %v296
        %v316 = vmul.f32 %v298, %v298
        %v317 = vadd.f32 %v315, %v316
        %318 = vadd.xlane.f32.xlu0 %v317
        %v319 = vpop.xlane.xlu0 %318
        %v320 = vadd.f32 %v314, %v319
        %321 = vst.msk [vmem:[%s214] sm:$0xff] %vm312, %v320
        %p322 = scmp.lt.s32.totalorder %s22, 1
        %s323 = scalar_select %p322, %s22, 1
        %s324 = smul.addr %s323, 8
        %s325 = scalar_lea.vmem %s2, %s324
        %p326 = scmp.lt.s32.totalorder %s22, 1
        %s327 = scalar_select %p326, %s22, 1
        %s328 = smul.addr %s327, 8
        %s329 = scalar_lea.vmem %s3, %s328
        // Predicated region
        $region37: #{tpu_custom_call.1} parent=27 // pred_check
          %p330 = pneg %p97
        $region38: #{tpu_custom_call.1} parent=27 // pred_check_branch
          %332 = sbr.rel (%p330) target = $region40
        $region39: #{tpu_custom_call.1} parent=27 // pred_region
          _
        $region40: #{tpu_custom_call.1} parent=27 // pred_fallthru
          _
        // Predicated region
        $region41: #{tpu_custom_call.1} parent=27 // pred_check
          %p333 = pneg %p123
        $region42: #{tpu_custom_call.1} parent=27 // pred_check_branch
          %335 = sbr.rel (%p333) target = $region44
        $region43: #{tpu_custom_call.1} parent=27 // pred_region
          _
        $region44: #{tpu_custom_call.1} parent=27 // pred_fallthru
          _
      $region28: #{tpu_custom_call.1} parent=5 // pred_fallthru
        _
      %p336 = scmp.le.s32.totalorder 2, %s13
      // Predicated region
      $region45: #{tpu_custom_call.1} parent=5 // pred_check
        %p337 = pneg %p336
      $region46: #{tpu_custom_call.1} parent=5 // pred_check_branch
        %339 = sbr.rel (%p337) target = $region48
      $region47: #{tpu_custom_call.1} parent=5 // pred_region
        %s340 = ssub.s32 %s13, 2
        // Predicated region
        $region49: #{tpu_custom_call.1} parent=47 // pred_check
          %p341 = pneg %p103
        $region50: #{tpu_custom_call.1} parent=47 // pred_check_branch
          %343 = sbr.rel (%p341) target = $region52
        $region51: #{tpu_custom_call.1} parent=47 // pred_region
          %p344 = scmp.lt.s32.totalorder %s24, 1
          %s345 = scalar_select %p344, %s24, 1
          %s346 = smul.addr %s345, 8
          %s347 = scalar_lea.vmem %s2, %s346
        $region52: #{tpu_custom_call.1} parent=47 // pred_fallthru
          _
        // Predicated region
        $region53: #{tpu_custom_call.1} parent=47 // pred_check
          %p348 = pneg %p129
        $region54: #{tpu_custom_call.1} parent=47 // pred_check_branch
          %350 = sbr.rel (%p348) target = $region56
        $region55: #{tpu_custom_call.1} parent=47 // pred_region
          %p351 = scmp.lt.s32.totalorder %s24, 1
          %s352 = scalar_select %p351, %s24, 1
          %s353 = smul.addr %s352, 8
          %s354 = scalar_lea.vmem %s3, %s353
        $region56: #{tpu_custom_call.1} parent=47 // pred_fallthru
          _
      $region48: #{tpu_custom_call.1} parent=5 // pred_fallthru
        _
    $region6: #{tpu_custom_call.1} parent=1 // loop_footer
      %s17 = sadd.s32 1, %s13
    $region7: #{tpu_custom_call.1} parent=1 // loop_footer_branch
      %12 = sbr.rel target = $region3
    $region8: #{tpu_custom_call.1} parent=1 // loop_exit
      _
    %355 = vsyncpa [#allocation3], 1
    %s356 = scalar_lea.sflag [#allocation3], 1
    %357 = vsyncpa %s356, 1

</llo_original>
